<compile_context>
chip_gen: v5e
topology: v5e:2x2
jax: 0.10.0
libtpu: 0.0.40
codegen_flags: <defaults>
</compile_context>

<pallas_src>
import jax
import jax.numpy as jnp
from jax.experimental import pallas as pl
from jax.experimental.pallas import tpu as pltpu

HID1 = 64     # encoder/decoder hidden width
LATENT = 16   # bottleneck width


def autoencoder_kernel(x_ref, w1_ref, b1_ref, w2_ref, b2_ref,
                       w3_ref, b3_ref, w4_ref, b4_ref, o_ref):
    # x_ref: (seq_len, TILE_B) -- batch on the lane (fast) dimension.
    x = x_ref[...]

    # encoder: Linear(seq_len, 64) + ReLU, Linear(64, 16)
    h1 = jnp.dot(w1_ref[...], x, preferred_element_type=jnp.float32) + b1_ref[...]
    h1 = jnp.maximum(h1, 0.0)                                         # (64, TB)
    z = jnp.dot(w2_ref[...], h1, preferred_element_type=jnp.float32) + b2_ref[...]

    # decoder: Linear(16, 64) + ReLU, Linear(64, seq_len)
    h2 = jnp.dot(w3_ref[...], z, preferred_element_type=jnp.float32) + b3_ref[...]
    h2 = jnp.maximum(h2, 0.0)                                         # (64, TB)
    recon = jnp.dot(w4_ref[...], h2, preferred_element_type=jnp.float32) + b4_ref[...]

    o_ref[...] = recon.astype(o_ref.dtype)                            # (S, TB)


def init_params(key, seq_len, dtype=jnp.float32):
    """PyTorch-style uniform(-1/sqrt(fan_in), 1/sqrt(fan_in)) init.

    Weights stored as (out_features, in_features); biases as (out_features, 1),
    matching the transposed (features, batch) kernel layout.
    """
    ks = jax.random.split(key, 8)

    def linear(kw, kb, fan_in, fan_out):
        bound = 1.0 / jnp.sqrt(jnp.asarray(fan_in, dtype))
        w = jax.random.uniform(kw, (fan_out, fan_in), dtype, -bound, bound)
        b = jax.random.uniform(kb, (fan_out, 1), dtype, -bound, bound)
        return w, b

    w1, b1 = linear(ks[0], ks[1], seq_len, HID1)    # encoder Linear(seq_len, 64)
    w2, b2 = linear(ks[2], ks[3], HID1, LATENT)     # encoder Linear(64, 16)
    w3, b3 = linear(ks[4], ks[5], LATENT, HID1)     # decoder Linear(16, 64)
    w4, b4 = linear(ks[6], ks[7], HID1, seq_len)    # decoder Linear(64, seq_len)
    return (w1, b1, w2, b2, w3, b3, w4, b4)


def autoencoder_forward(x, params, *, tile_b=1024):
    """x: (batch, seq_len, 1) or (batch, seq_len) -> recon (batch, seq_len, 1)."""
    w1, b1, w2, b2, w3, b3, w4, b4 = params
    batch = x.shape[0]
    x_flat = x.reshape(batch, -1)                   # nn.Flatten
    seq_len = x_flat.shape[1]
    dtype = x_flat.dtype

    # Pick the batch tile: whole batch if small (block == full dim is always
    # legal), otherwise a lane-aligned tile with padding to a multiple of it.
    if batch <= tile_b:
        tb = batch
        padded = batch
    else:
        tb = tile_b                                 # multiple of 128
        padded = pl.cdiv(batch, tb) * tb
        x_flat = jnp.pad(x_flat, ((0, padded - batch), (0, 0)))

    x_t = x_flat.T                                  # (seq_len, padded): batch on lanes
    grid = (padded // tb,)

    def resident(a):
        # Full-array block with constant index_map -> stays VMEM-resident
        # across all grid steps.
        return pl.BlockSpec(a.shape, lambda i: (0, 0))

    in_specs = [
        pl.BlockSpec((seq_len, tb), lambda i: (0, i)),     # x^T tile
        resident(w1), resident(b1), resident(w2), resident(b2),
        resident(w3), resident(b3), resident(w4), resident(b4),
    ]
    out_specs = pl.BlockSpec((seq_len, tb), lambda i: (0, i))

    itemsize = jnp.dtype(dtype).itemsize
    weight_bytes = sum(int(a.size) * a.dtype.itemsize for a in params)
    cost = pl.CostEstimate(
        flops=2 * padded * (2 * seq_len * HID1 + 2 * HID1 * LATENT),
        transcendentals=0,
        bytes_accessed=2 * padded * seq_len * itemsize + weight_bytes,
    )

    recon_t = pl.pallas_call(
        autoencoder_kernel,
        out_shape=jax.ShapeDtypeStruct((seq_len, padded), dtype),
        grid=grid,
        in_specs=in_specs,
        out_specs=out_specs,
        compiler_params=pltpu.CompilerParams(
            dimension_semantics=("parallel",),      # shard batch tiles across TCs
            vmem_limit_bytes=32 * 1024 * 1024,      # safe on v5e/v6e/v7x budgets
        ),
        cost_estimate=cost,
    )(x_t, w1, b1, w2, b2, w3, b3, w4, b4)

    recon = recon_t.T[:batch]                       # un-transpose, drop padding
    return recon.reshape(batch, -1, 1)              # view(B, -1, 1)


def ref_forward(x, params):
    """Pure-JAX reference matching the PyTorch module."""
    w1, b1, w2, b2, w3, b3, w4, b4 = params
    b = x.shape[0]
    xf = x.reshape(b, -1)
    h1 = jnp.maximum(xf @ w1.T + b1[:, 0], 0.0)
    z = h1 @ w2.T + b2[:, 0]
    h2 = jnp.maximum(z @ w3.T + b3[:, 0], 0.0)
    r = h2 @ w4.T + b4[:, 0]
    return r.reshape(b, -1, 1)


if __name__ == "__main__":
    key = jax.random.PRNGKey(0)
    k_params, k_x1, k_x2 = jax.random.split(key, 3)

    batch, seq_len = 4, 8
    params = init_params(k_params, seq_len)

    # small-shape check (single grid step, tile == full batch)
    x = jax.random.normal(k_x1, (batch, seq_len, 1), dtype=jnp.float32)
    recon = jax.block_until_ready(autoencoder_forward(x, params))
    assert recon.shape == (batch, seq_len, 1), recon.shape
    assert recon.dtype == jnp.float32
    assert jnp.allclose(recon, ref_forward(x, params), atol=1e-5, rtol=1e-5)

    # exercise the batch-tiled grid + padding path (grid=(3,), 300 -> 384 pad)
    batch2 = 300
    x2 = jax.random.normal(k_x2, (batch2, seq_len, 1), dtype=jnp.float32)
    recon2 = jax.block_until_ready(autoencoder_forward(x2, params, tile_b=128))
    assert recon2.shape == (batch2, seq_len, 1), recon2.shape
    assert jnp.allclose(recon2, ref_forward(x2, params), atol=1e-5, rtol=1e-5)

    print("KERNEL_OK")
</pallas_src>

<mosaic_0001>
module attributes {stable_mosaic.version = 11 : i64} {
  func.func @autoencoder_kernel(%arg0: i32, %arg1: memref<8x4xf32, #tpu.memory_space<vmem>>, %arg2: memref<64x8xf32, #tpu.memory_space<vmem>>, %arg3: memref<64x1xf32, #tpu.memory_space<vmem>>, %arg4: memref<16x64xf32, #tpu.memory_space<vmem>>, %arg5: memref<16x1xf32, #tpu.memory_space<vmem>>, %arg6: memref<64x16xf32, #tpu.memory_space<vmem>>, %arg7: memref<64x1xf32, #tpu.memory_space<vmem>>, %arg8: memref<8x64xf32, #tpu.memory_space<vmem>>, %arg9: memref<8x1xf32, #tpu.memory_space<vmem>>, %arg10: memref<8x4xf32, #tpu.memory_space<vmem>>) attributes {dimension_semantics = [#tpu.dimension_semantics<parallel>], iteration_bounds = array<i64: 1>, scalar_prefetch = 0 : i64, scratch_operands = 0 : i64, tpu.core_type = #tpu.core_type<tc>, window_params = [{transform_indices = @transform_0, window_bounds = array<i64: 8, 4>}, {pipeline_mode = #tpu.pipeline_mode<synchronous>, transform_indices = @transform_1, window_bounds = array<i64: 64, 8>}, {pipeline_mode = #tpu.pipeline_mode<synchronous>, transform_indices = @transform_2, window_bounds = array<i64: 64, 1>}, {pipeline_mode = #tpu.pipeline_mode<synchronous>, transform_indices = @transform_3, window_bounds = array<i64: 16, 64>}, {pipeline_mode = #tpu.pipeline_mode<synchronous>, transform_indices = @transform_4, window_bounds = array<i64: 16, 1>}, {pipeline_mode = #tpu.pipeline_mode<synchronous>, transform_indices = @transform_5, window_bounds = array<i64: 64, 16>}, {pipeline_mode = #tpu.pipeline_mode<synchronous>, transform_indices = @transform_6, window_bounds = array<i64: 64, 1>}, {pipeline_mode = #tpu.pipeline_mode<synchronous>, transform_indices = @transform_7, window_bounds = array<i64: 8, 64>}, {pipeline_mode = #tpu.pipeline_mode<synchronous>, transform_indices = @transform_8, window_bounds = array<i64: 8, 1>}, {transform_indices = @transform_9, window_bounds = array<i64: 8, 4>}]} {
    %c0 = arith.constant 0 : index
    %c0_0 = arith.constant 0 : index
    %0 = vector.load %arg1[%c0, %c0_0] : memref<8x4xf32, #tpu.memory_space<vmem>>, vector<8x4xf32>
    %c0_1 = arith.constant 0 : index
    %c0_2 = arith.constant 0 : index
    %1 = vector.load %arg2[%c0_1, %c0_2] : memref<64x8xf32, #tpu.memory_space<vmem>>, vector<64x8xf32>
    %cst = arith.constant dense<0.000000e+00> : vector<64x4xf32>
    %2 = tpu.matmul %1, %0, %cst {dimension_numbers = #tpu.dot_dimension_numbers<[1], [0], [0], [1], [0, 0, 1, 1], [], []>} : vector<64x8xf32>, vector<8x4xf32>, vector<64x4xf32> -> vector<64x4xf32>
    %c0_3 = arith.constant 0 : index
    %c0_4 = arith.constant 0 : index
    %3 = vector.load %arg3[%c0_3, %c0_4] : memref<64x1xf32, #tpu.memory_space<vmem>>, vector<64x1xf32>
    %4 = vector.broadcast %3 : vector<64x1xf32> to vector<64x4xf32>
    %5 = arith.addf %2, %4 : vector<64x4xf32>
    %cst_5 = arith.constant 0.000000e+00 : f32
    %6 = vector.broadcast %cst_5 : f32 to vector<64x4xf32>
    %7 = arith.maximumf %5, %6 : vector<64x4xf32>
    %c0_6 = arith.constant 0 : index
    %c0_7 = arith.constant 0 : index
    %8 = vector.load %arg4[%c0_6, %c0_7] : memref<16x64xf32, #tpu.memory_space<vmem>>, vector<16x64xf32>
    %cst_8 = arith.constant dense<0.000000e+00> : vector<16x4xf32>
    %9 = tpu.matmul %8, %7, %cst_8 {dimension_numbers = #tpu.dot_dimension_numbers<[1], [0], [0], [1], [0, 0, 1, 1], [], []>} : vector<16x64xf32>, vector<64x4xf32>, vector<16x4xf32> -> vector<16x4xf32>
    %c0_9 = arith.constant 0 : index
    %c0_10 = arith.constant 0 : index
    %10 = vector.load %arg5[%c0_9, %c0_10] : memref<16x1xf32, #tpu.memory_space<vmem>>, vector<16x1xf32>
    %11 = vector.broadcast %10 : vector<16x1xf32> to vector<16x4xf32>
    %12 = arith.addf %9, %11 : vector<16x4xf32>
    %c0_11 = arith.constant 0 : index
    %c0_12 = arith.constant 0 : index
    %13 = vector.load %arg6[%c0_11, %c0_12] : memref<64x16xf32, #tpu.memory_space<vmem>>, vector<64x16xf32>
    %cst_13 = arith.constant dense<0.000000e+00> : vector<64x4xf32>
    %14 = tpu.matmul %13, %12, %cst_13 {dimension_numbers = #tpu.dot_dimension_numbers<[1], [0], [0], [1], [0, 0, 1, 1], [], []>} : vector<64x16xf32>, vector<16x4xf32>, vector<64x4xf32> -> vector<64x4xf32>
    %c0_14 = arith.constant 0 : index
    %c0_15 = arith.constant 0 : index
    %15 = vector.load %arg7[%c0_14, %c0_15] : memref<64x1xf32, #tpu.memory_space<vmem>>, vector<64x1xf32>
    %16 = vector.broadcast %15 : vector<64x1xf32> to vector<64x4xf32>
    %17 = arith.addf %14, %16 : vector<64x4xf32>
    %cst_16 = arith.constant 0.000000e+00 : f32
    %18 = vector.broadcast %cst_16 : f32 to vector<64x4xf32>
    %19 = arith.maximumf %17, %18 : vector<64x4xf32>
    %c0_17 = arith.constant 0 : index
    %c0_18 = arith.constant 0 : index
    %20 = vector.load %arg8[%c0_17, %c0_18] : memref<8x64xf32, #tpu.memory_space<vmem>>, vector<8x64xf32>
    %cst_19 = arith.constant dense<0.000000e+00> : vector<8x4xf32>
    %21 = tpu.matmul %20, %19, %cst_19 {dimension_numbers = #tpu.dot_dimension_numbers<[1], [0], [0], [1], [0, 0, 1, 1], [], []>} : vector<8x64xf32>, vector<64x4xf32>, vector<8x4xf32> -> vector<8x4xf32>
    %c0_20 = arith.constant 0 : index
    %c0_21 = arith.constant 0 : index
    %22 = vector.load %arg9[%c0_20, %c0_21] : memref<8x1xf32, #tpu.memory_space<vmem>>, vector<8x1xf32>
    %23 = vector.broadcast %22 : vector<8x1xf32> to vector<8x4xf32>
    %24 = arith.addf %21, %23 : vector<8x4xf32>
    %c0_22 = arith.constant 0 : index
    %c0_23 = arith.constant 0 : index
    %25 = vector.load %arg10[%c0_22, %c0_23] : memref<8x4xf32, #tpu.memory_space<vmem>>, vector<8x4xf32>
    tpu.vector_store %arg10[%c0_22, %c0_23], %24 {strides = array<i32>} : memref<8x4xf32, #tpu.memory_space<vmem>>, vector<8x4xf32>,
    return
  }
  func.func @transform_0(%arg0: i32) -> (i32, i32) {
    %c0_i32 = arith.constant 0 : i32
    %c0_i32_0 = arith.constant 0 : i32
    return %c0_i32, %arg0 : i32, i32
  }
  func.func @transform_1(%arg0: i32) -> (i32, i32) {
    %c0_i32 = arith.constant 0 : i32
    %c0_i32_0 = arith.constant 0 : i32
    %c0_i32_1 = arith.constant 0 : i32
    return %c0_i32, %c0_i32_0 : i32, i32
  }
  func.func @transform_2(%arg0: i32) -> (i32, i32) {
    %c0_i32 = arith.constant 0 : i32
    %c0_i32_0 = arith.constant 0 : i32
    %c0_i32_1 = arith.constant 0 : i32
    return %c0_i32, %c0_i32_0 : i32, i32
  }
  func.func @transform_3(%arg0: i32) -> (i32, i32) {
    %c0_i32 = arith.constant 0 : i32
    %c0_i32_0 = arith.constant 0 : i32
    %c0_i32_1 = arith.constant 0 : i32
    return %c0_i32, %c0_i32_0 : i32, i32
  }
  func.func @transform_4(%arg0: i32) -> (i32, i32) {
    %c0_i32 = arith.constant 0 : i32
    %c0_i32_0 = arith.constant 0 : i32
    %c0_i32_1 = arith.constant 0 : i32
    return %c0_i32, %c0_i32_0 : i32, i32
  }
  func.func @transform_5(%arg0: i32) -> (i32, i32) {
    %c0_i32 = arith.constant 0 : i32
    %c0_i32_0 = arith.constant 0 : i32
    %c0_i32_1 = arith.constant 0 : i32
    return %c0_i32, %c0_i32_0 : i32, i32
  }
  func.func @transform_6(%arg0: i32) -> (i32, i32) {
    %c0_i32 = arith.constant 0 : i32
    %c0_i32_0 = arith.constant 0 : i32
    %c0_i32_1 = arith.constant 0 : i32
    return %c0_i32, %c0_i32_0 : i32, i32
  }
  func.func @transform_7(%arg0: i32) -> (i32, i32) {
    %c0_i32 = arith.constant 0 : i32
    %c0_i32_0 = arith.constant 0 : i32
    %c0_i32_1 = arith.constant 0 : i32
    return %c0_i32, %c0_i32_0 : i32, i32
  }
  func.func @transform_8(%arg0: i32) -> (i32, i32) {
    %c0_i32 = arith.constant 0 : i32
    %c0_i32_0 = arith.constant 0 : i32
    %c0_i32_1 = arith.constant 0 : i32
    return %c0_i32, %c0_i32_0 : i32, i32
  }
  func.func @transform_9(%arg0: i32) -> (i32, i32) {
    %c0_i32 = arith.constant 0 : i32
    %c0_i32_0 = arith.constant 0 : i32
    return %c0_i32, %arg0 : i32, i32
  }
}

</mosaic_0001>

<llo_original>
// kernel: tpu_custom_call.1
$region0: #{tpu_custom_call.1}
  #allocation0 [shape = 'u32[]', space=smem, size = 0x4, offset = 0x4, fixed_abs, tag = 'smem constant byte address 0x4 - core index']
  #allocation1 [shape = 'u32[72,128]{1,0:T(1,128)}', space=vmem, size = 0x9000, scoped, tag = 'internal scratch']
  %s0 = inlined_call_operand.vmem [shape: f32[8,4], index: 0, kind: input, shape index: {}]
  %s1 = inlined_call_operand.vmem [shape: f32[64,8], index: 1, kind: input, shape index: {}]
  %s2 = inlined_call_operand.vmem [shape: f32[64,1], index: 2, kind: input, shape index: {}]
  %s3 = inlined_call_operand.vmem [shape: f32[16,64], index: 3, kind: input, shape index: {}]
  %s4 = inlined_call_operand.vmem [shape: f32[16,1], index: 4, kind: input, shape index: {}]
  %s5 = inlined_call_operand.vmem [shape: f32[64,16], index: 5, kind: input, shape index: {}]
  %s6 = inlined_call_operand.vmem [shape: f32[64,1], index: 6, kind: input, shape index: {}]
  %s7 = inlined_call_operand.vmem [shape: f32[8,64], index: 7, kind: input, shape index: {}]
  %s8 = inlined_call_operand.vmem [shape: f32[8,1], index: 8, kind: input, shape index: {}]
  %s9 = inlined_call_operand.vmem [shape: f32[8,4], index: 9, kind: output, shape index: {}]
  %s10 = sld [smem:[#allocation0]]
  $region46: #{tpu_custom_call.1} parent=0
    _
  %s12 = ssub.s32 1, %s10
  %s13 = scalar_select 0, %s12, %s10
  // Predicated region
  $region2: #{tpu_custom_call.1} parent=0 // pred_check
    _
  $region3: #{tpu_custom_call.1} parent=0 // pred_check_branch
    %15 = sbr.rel (0) target = $region5
  $region4: #{tpu_custom_call.1} parent=0 // pred_region
    _
  $region5: #{tpu_custom_call.1} parent=0 // pred_fallthru
    _
  // Predicated region
  $region6: #{tpu_custom_call.1} parent=0 // pred_check
    _
  $region7: #{tpu_custom_call.1} parent=0 // pred_check_branch
    %17 = sbr.rel (0) target = $region9
  $region8: #{tpu_custom_call.1} parent=0 // pred_region
    _
  $region9: #{tpu_custom_call.1} parent=0 // pred_fallthru
    _
  // Predicated region
  $region10: #{tpu_custom_call.1} parent=0 // pred_check
    _
  $region11: #{tpu_custom_call.1} parent=0 // pred_check_branch
    %19 = sbr.rel (0) target = $region13
  $region12: #{tpu_custom_call.1} parent=0 // pred_region
    _
  $region13: #{tpu_custom_call.1} parent=0 // pred_fallthru
    _
  // Predicated region
  $region14: #{tpu_custom_call.1} parent=0 // pred_check
    _
  $region15: #{tpu_custom_call.1} parent=0 // pred_check_branch
    %21 = sbr.rel (0) target = $region17
  $region16: #{tpu_custom_call.1} parent=0 // pred_region
    _
  $region17: #{tpu_custom_call.1} parent=0 // pred_fallthru
    _
  // Predicated region
  $region18: #{tpu_custom_call.1} parent=0 // pred_check
    _
  $region19: #{tpu_custom_call.1} parent=0 // pred_check_branch
    %23 = sbr.rel (0) target = $region21
  $region20: #{tpu_custom_call.1} parent=0 // pred_region
    _
  $region21: #{tpu_custom_call.1} parent=0 // pred_fallthru
    _
  // Predicated region
  $region22: #{tpu_custom_call.1} parent=0 // pred_check
    _
  $region23: #{tpu_custom_call.1} parent=0 // pred_check_branch
    %25 = sbr.rel (0) target = $region25
  $region24: #{tpu_custom_call.1} parent=0 // pred_region
    _
  $region25: #{tpu_custom_call.1} parent=0 // pred_fallthru
    _
  // Predicated region
  $region26: #{tpu_custom_call.1} parent=0 // pred_check
    _
  $region27: #{tpu_custom_call.1} parent=0 // pred_check_branch
    %27 = sbr.rel (0) target = $region29
  $region28: #{tpu_custom_call.1} parent=0 // pred_region
    _
  $region29: #{tpu_custom_call.1} parent=0 // pred_fallthru
    _
  // Predicated region
  $region30: #{tpu_custom_call.1} parent=0 // pred_check
    _
  $region31: #{tpu_custom_call.1} parent=0 // pred_check_branch
    %29 = sbr.rel (0) target = $region33
  $region32: #{tpu_custom_call.1} parent=0 // pred_region
    _
  $region33: #{tpu_custom_call.1} parent=0 // pred_fallthru
    _
  // Predicated region
  $region34: #{tpu_custom_call.1} parent=0 // pred_check
    _
  $region35: #{tpu_custom_call.1} parent=0 // pred_check_branch
    %31 = sbr.rel (0) target = $region37
  $region36: #{tpu_custom_call.1} parent=0 // pred_region
    _
  $region37: #{tpu_custom_call.1} parent=0 // pred_fallthru
    _
  %v32 = vld [vmem:[%s0] sm:$0xff]
  %v33 = vld [vmem:[%s1] sm:$0xff]
  %v34 = vld [vmem:[%s1 + $0x8] sm:$0xff]
  %v35 = vld [vmem:[%s1 + $0x10] sm:$0xff]
  %v36 = vld [vmem:[%s1 + $0x18] sm:$0xff]
  %v37 = vld [vmem:[%s1 + $0x20] sm:$0xff]
  %v38 = vld [vmem:[%s1 + $0x28] sm:$0xff]
  %v39 = vld [vmem:[%s1 + $0x30] sm:$0xff]
  %v40 = vld [vmem:[%s1 + $0x38] sm:$0xff]
  %v41 = vld [vmem:[%s2] sm:$0xff]
  %v42 = vld [vmem:[%s2 + $0x8] sm:$0xff]
  %v43 = vld [vmem:[%s2 + $0x10] sm:$0xff]
  %v44 = vld [vmem:[%s2 + $0x18] sm:$0xff]
  %v45 = vld [vmem:[%s2 + $0x20] sm:$0xff]
  %v46 = vld [vmem:[%s2 + $0x28] sm:$0xff]
  %v47 = vld [vmem:[%s2 + $0x30] sm:$0xff]
  %v48 = vld [vmem:[%s2 + $0x38] sm:$0xff]
  %50 = vset.pattern.permute.xlu0 0
  %51 = vperm.xlu0 %50, %v41
  %v52 = vpop.permute.xlu0 %51
  %55 = vset.pattern.permute.xlu0 0
  %56 = vperm.xlu0 %55, %v42
  %v57 = vpop.permute.xlu0 %56
  %60 = vset.pattern.permute.xlu0 0
  %61 = vperm.xlu0 %60, %v43
  %v62 = vpop.permute.xlu0 %61
  %65 = vset.pattern.permute.xlu0 0
  %66 = vperm.xlu0 %65, %v44
  %v67 = vpop.permute.xlu0 %66
  %70 = vset.pattern.permute.xlu0 0
  %71 = vperm.xlu0 %70, %v45
  %v72 = vpop.permute.xlu0 %71
  %75 = vset.pattern.permute.xlu0 0
  %76 = vperm.xlu0 %75, %v46
  %v77 = vpop.permute.xlu0 %76
  %80 = vset.pattern.permute.xlu0 0
  %81 = vperm.xlu0 %80, %v47
  %v82 = vpop.permute.xlu0 %81
  %85 = vset.pattern.permute.xlu0 0
  %86 = vperm.xlu0 %85, %v48
  %v87 = vpop.permute.xlu0 %86
  %vm89 = vcmask 64512
  %v91 = vsel %vm89, %v33, 0
  %v94 = vsel %vm89, %v34, 0
  %v97 = vsel %vm89, %v35, 0
  %v100 = vsel %vm89, %v36, 0
  %v103 = vsel %vm89, %v37, 0
  %v106 = vsel %vm89, %v38, 0
  %v109 = vsel %vm89, %v39, 0
  %v112 = vsel %vm89, %v40, 0
  %114 = vmatpush.msra.mxu0 0.0
  %115 = vmatpush.msra.mxu0 0.0
  %116 = vmatpush.msra.mxu0 0.0
  %117 = vmatpush.msra.mxu0 0.0
  %118 = vmatpush.msra.mxu0 0.0
  %119 = vmatpush.msra.mxu0 0.0
  %120 = vmatpush.msra.mxu0 0.0
  %121 = vmatpush.msra.mxu0 0.0
  %122 = vmatpush.msra.mxu0 0.0
  %123 = vmatpush.msra.mxu0 0.0
  %124 = vmatpush.msra.mxu0 0.0
  %125 = vmatpush.msra.mxu0 0.0
  %126 = vmatpush.msra.mxu0 0.0
  %127 = vmatpush.msra.mxu0 0.0
  %128 = vmatpush.msra.mxu0 0.0
  %129 = vmatpush.msra.mxu0 %v32
  %130 = vmatmul.f32.gmra.mxu0 %v91
  %v131 = vpop.f32.mrf.mxu0
  %v132 = vadd.f32 %v52, %v131
  %133 = vmatmul.f32.gmra.mxu0 %v94
  %v134 = vpop.f32.mrf.mxu0
  %v135 = vadd.f32 %v57, %v134
  %136 = vmatmul.f32.gmra.mxu0 %v97
  %v137 = vpop.f32.mrf.mxu0
  %v138 = vadd.f32 %v62, %v137
  %139 = vmatmul.f32.gmra.mxu0 %v100
  %v140 = vpop.f32.mrf.mxu0
  %v141 = vadd.f32 %v67, %v140
  %142 = vmatmul.f32.gmra.mxu0 %v103
  %v143 = vpop.f32.mrf.mxu0
  %v144 = vadd.f32 %v72, %v143
  %145 = vmatmul.f32.gmra.mxu0 %v106
  %v146 = vpop.f32.mrf.mxu0
  %v147 = vadd.f32 %v77, %v146
  %148 = vmatmul.f32.gmra.mxu0 %v109
  %v149 = vpop.f32.mrf.mxu0
  %v150 = vadd.f32 %v82, %v149
  %151 = vmatmul.f32.gmra.mxu0 %v112
  %v152 = vpop.f32.mrf.mxu0
  %v153 = vadd.f32 %v87, %v152
  %154 = vdwg.mxu0
  %v155 = vmax.f32 %v132, 0.0
  %v156 = vmax.f32 %v135, 0.0
  %v157 = vmax.f32 %v138, 0.0
  %v158 = vmax.f32 %v141, 0.0
  %v159 = vmax.f32 %v144, 0.0
  %v160 = vmax.f32 %v147, 0.0
  %v161 = vmax.f32 %v150, 0.0
  %v162 = vmax.f32 %v153, 0.0
  %v163 = vld [vmem:[%s3] sm:$0xff]
  %v164 = vld [vmem:[%s3 + $0x8] sm:$0xff]
  %v165 = vld [vmem:[%s4] sm:$0xff]
  %v166 = vld [vmem:[%s4 + $0x8] sm:$0xff]
  %168 = vset.pattern.permute.xlu0 0
  %169 = vperm.xlu0 %168, %v165
  %v170 = vpop.permute.xlu0 %169
  %173 = vset.pattern.permute.xlu0 0
  %174 = vperm.xlu0 %173, %v166
  %v175 = vpop.permute.xlu0 %174
  %vm177 = vcmask 523264
  %v179 = vsel %vm177, %v163, 0
  %v182 = vsel %vm177, %v164, 0
  %184 = vmatpush.msra.mxu0 0.0
  %185 = vmatpush.msra.mxu0 0.0
  %186 = vmatpush.msra.mxu0 0.0
  %187 = vmatpush.msra.mxu0 0.0
  %188 = vmatpush.msra.mxu0 0.0
  %189 = vmatpush.msra.mxu0 0.0
  %190 = vmatpush.msra.mxu0 0.0
  %191 = vmatpush.msra.mxu0 0.0
  %192 = vmatpush.msra.mxu0 %v162
  %193 = vmatpush.msra.mxu0 %v161
  %194 = vmatpush.msra.mxu0 %v160
  %195 = vmatpush.msra.mxu0 %v159
  %196 = vmatpush.msra.mxu0 %v158
  %197 = vmatpush.msra.mxu0 %v157
  %198 = vmatpush.msra.mxu0 %v156
  %199 = vmatpush.msra.mxu0 %v155
  %200 = vmatmul.f32.gmra.mxu0 %v179
  %v201 = vpop.f32.mrf.mxu0
  %v202 = vadd.f32 %v170, %v201
  %203 = vmatmul.f32.gmra.mxu0 %v182
  %v204 = vpop.f32.mrf.mxu0
  %v205 = vadd.f32 %v175, %v204
  %206 = vdwg.mxu0
  %v207 = vld [vmem:[%s5] sm:$0xff]
  %v208 = vld [vmem:[%s5 + $0x8] sm:$0xff]
  %v209 = vld [vmem:[%s5 + $0x10] sm:$0xff]
  %v210 = vld [vmem:[%s5 + $0x18] sm:$0xff]
  %v211 = vld [vmem:[%s5 + $0x20] sm:$0xff]
  %v212 = vld [vmem:[%s5 + $0x28] sm:$0xff]
  %v213 = vld [vmem:[%s5 + $0x30] sm:$0xff]
  %v214 = vld [vmem:[%s5 + $0x38] sm:$0xff]
  %v215 = vld [vmem:[%s6] sm:$0xff]
  %v216 = vld [vmem:[%s6 + $0x8] sm:$0xff]
  %v217 = vld [vmem:[%s6 + $0x10] sm:$0xff]
  %v218 = vld [vmem:[%s6 + $0x18] sm:$0xff]
  %v219 = vld [vmem:[%s6 + $0x20] sm:$0xff]
  %v220 = vld [vmem:[%s6 + $0x28] sm:$0xff]
  %v221 = vld [vmem:[%s6 + $0x30] sm:$0xff]
  %v222 = vld [vmem:[%s6 + $0x38] sm:$0xff]
  %224 = vset.pattern.permute.xlu0 0
  %225 = vperm.xlu0 %224, %v215
  %v226 = vpop.permute.xlu0 %225
  %229 = vset.pattern.permute.xlu0 0
  %230 = vperm.xlu0 %229, %v216
  %v231 = vpop.permute.xlu0 %230
  %234 = vset.pattern.permute.xlu0 0
  %235 = vperm.xlu0 %234, %v217
  %v236 = vpop.permute.xlu0 %235
  %239 = vset.pattern.permute.xlu0 0
  %240 = vperm.xlu0 %239, %v218
  %v241 = vpop.permute.xlu0 %240
  %244 = vset.pattern.permute.xlu0 0
  %245 = vperm.xlu0 %244, %v219
  %v246 = vpop.permute.xlu0 %245
  %249 = vset.pattern.permute.xlu0 0
  %250 = vperm.xlu0 %249, %v220
  %v251 = vpop.permute.xlu0 %250
  %254 = vset.pattern.permute.xlu0 0
  %255 = vperm.xlu0 %254, %v221
  %v256 = vpop.permute.xlu0 %255
  %259 = vset.pattern.permute.xlu0 0
  %260 = vperm.xlu0 %259, %v222
  %v261 = vpop.permute.xlu0 %260
  %vm263 = vcmask 130048
  %v265 = vsel %vm263, %v207, 0
  %v268 = vsel %vm263, %v208, 0
  %v271 = vsel %vm263, %v209, 0
  %v274 = vsel %vm263, %v210, 0
  %v277 = vsel %vm263, %v211, 0
  %v280 = vsel %vm263, %v212, 0
  %v283 = vsel %vm263, %v213, 0
  %v286 = vsel %vm263, %v214, 0
  %288 = vmatpush.msra.mxu0 0.0
  %289 = vmatpush.msra.mxu0 0.0
  %290 = vmatpush.msra.mxu0 0.0
  %291 = vmatpush.msra.mxu0 0.0
  %292 = vmatpush.msra.mxu0 0.0
  %293 = vmatpush.msra.mxu0 0.0
  %294 = vmatpush.msra.mxu0 0.0
  %295 = vmatpush.msra.mxu0 0.0
  %296 = vmatpush.msra.mxu0 0.0
  %297 = vmatpush.msra.mxu0 0.0
  %298 = vmatpush.msra.mxu0 0.0
  %299 = vmatpush.msra.mxu0 0.0
  %300 = vmatpush.msra.mxu0 0.0
  %301 = vmatpush.msra.mxu0 0.0
  %302 = vmatpush.msra.mxu0 %v205
  %303 = vmatpush.msra.mxu0 %v202
  %304 = vmatmul.f32.gmra.mxu0 %v265
  %v305 = vpop.f32.mrf.mxu0
  %v306 = vadd.f32 %v226, %v305
  %307 = vmatmul.f32.gmra.mxu0 %v268
  %v308 = vpop.f32.mrf.mxu0
  %v309 = vadd.f32 %v231, %v308
  %310 = vmatmul.f32.gmra.mxu0 %v271
  %v311 = vpop.f32.mrf.mxu0
  %v312 = vadd.f32 %v236, %v311
  %313 = vmatmul.f32.gmra.mxu0 %v274
  %v314 = vpop.f32.mrf.mxu0
  %v315 = vadd.f32 %v241, %v314
  %316 = vmatmul.f32.gmra.mxu0 %v277
  %v317 = vpop.f32.mrf.mxu0
  %v318 = vadd.f32 %v246, %v317
  %319 = vmatmul.f32.gmra.mxu0 %v280
  %v320 = vpop.f32.mrf.mxu0
  %v321 = vadd.f32 %v251, %v320
  %322 = vmatmul.f32.gmra.mxu0 %v283
  %v323 = vpop.f32.mrf.mxu0
  %v324 = vadd.f32 %v256, %v323
  %325 = vmatmul.f32.gmra.mxu0 %v286
  %v326 = vpop.f32.mrf.mxu0
  %v327 = vadd.f32 %v261, %v326
  %328 = vdwg.mxu0
  %v329 = vmax.f32 %v306, 0.0
  %v330 = vmax.f32 %v309, 0.0
  %v331 = vmax.f32 %v312, 0.0
  %v332 = vmax.f32 %v315, 0.0
  %v333 = vmax.f32 %v318, 0.0
  %v334 = vmax.f32 %v321, 0.0
  %v335 = vmax.f32 %v324, 0.0
  %v336 = vmax.f32 %v327, 0.0
  %v337 = vld [vmem:[%s7] sm:$0xff]
  %v338 = vld [vmem:[%s8] sm:$0xff]
  %340 = vset.pattern.permute.xlu0 0
  %341 = vperm.xlu0 %340, %v338
  %v342 = vpop.permute.xlu0 %341
  %v345 = vsel %vm177, %v337, 0
  %347 = vmatpush.msra.mxu0 0.0
  %348 = vmatpush.msra.mxu0 0.0
  %349 = vmatpush.msra.mxu0 0.0
  %350 = vmatpush.msra.mxu0 0.0
  %351 = vmatpush.msra.mxu0 0.0
  %352 = vmatpush.msra.mxu0 0.0
  %353 = vmatpush.msra.mxu0 0.0
  %354 = vmatpush.msra.mxu0 0.0
  %355 = vmatpush.msra.mxu0 %v336
  %356 = vmatpush.msra.mxu0 %v335
  %357 = vmatpush.msra.mxu0 %v334
  %358 = vmatpush.msra.mxu0 %v333
  %359 = vmatpush.msra.mxu0 %v332
  %360 = vmatpush.msra.mxu0 %v331
  %361 = vmatpush.msra.mxu0 %v330
  %362 = vmatpush.msra.mxu0 %v329
  %363 = vmatmul.f32.gmra.mxu0 %v345
  %v364 = vpop.f32.mrf.mxu0
  %v365 = vadd.f32 %v342, %v364
  %366 = vdwg.mxu0
  %vm367 = vcmask 31744
  %368 = vst.msk [vmem:[%s9] sm:$0xff] %vm367, %v365
  // Predicated region
  $region38: #{tpu_custom_call.1} parent=0 // pred_check
    _
  $region39: #{tpu_custom_call.1} parent=0 // pred_check_branch
    %370 = sbr.rel (0) target = $region41
  $region40: #{tpu_custom_call.1} parent=0 // pred_region
    _
  $region41: #{tpu_custom_call.1} parent=0 // pred_fallthru
    _
  // Predicated region
  $region42: #{tpu_custom_call.1} parent=0 // pred_check
    _
  $region43: #{tpu_custom_call.1} parent=0 // pred_check_branch
    %372 = sbr.rel (0) target = $region45
  $region44: #{tpu_custom_call.1} parent=0 // pred_region
    _
  $region45: #{tpu_custom_call.1} parent=0 // pred_fallthru
    _

</llo_original>
